<compile_context>
chip_gen: v7x
topology: tpu7x:2x2x1
jax: 0.10.0
libtpu: 0.0.40
codegen_flags: <defaults>
</compile_context>

<pallas_src>
import jax
import jax.numpy as jnp
from jax.experimental import pallas as pl
from jax.experimental.pallas import tpu as pltpu  # noqa: F401

EPS = 1e-3


def _bn_kernel(x_ref, g_ref, b_ref, o_ref):
    # x_ref : (N, C, M) f32 -- channels on sublanes, M on lanes
    # g_ref : (C, 1) f32, b_ref : (C, 1) f32
    n, c, m = x_ref.shape
    inv_cnt = 1.0 / (n * m)

    # --- Pass 1: batch statistics (lane-axis + trivial leading-axis reduce) ---
    x = x_ref[...]
    s = jnp.sum(x, axis=(0, 2), keepdims=True)         # (1, C, 1)
    ss = jnp.sum(x * x, axis=(0, 2), keepdims=True)    # (1, C, 1)
    mean = s * inv_cnt
    # Clamp: E[x^2] - E[x]^2 can go slightly negative from f32 cancellation.
    var = jnp.maximum(ss * inv_cnt - mean * mean, 0.0)  # biased var (training BN)
    inv_std = jax.lax.rsqrt(var + EPS)                  # (1, C, 1)

    gamma = g_ref[...]                                  # (C, 1)
    beta = b_ref[...]                                   # (C, 1)

    # Fold affine: y = x * scale + shift (2 VPU ops per element).
    scale = inv_std * gamma                             # (1, C, 1)
    shift = beta - mean * scale                         # (1, C, 1)

    # --- Pass 2: normalize. Re-read x from VMEM (vld is nearly free) so the
    # full slab is not kept live in vregs across both phases. ---
    o_ref[...] = x_ref[...] * scale + shift


def _bn_forward(x_nchw, gamma, beta):
    """x_nchw: (N, C, H, W) float32; gamma/beta: (C,) float32."""
    n, c, h, w = x_nchw.shape
    m = h * w

    # Pure metadata reshapes -- no data movement, no transposes, no stacking.
    x3d = x_nchw.reshape(n, c, m)
    g2 = gamma.astype(jnp.float32).reshape(c, 1)
    b2 = beta.astype(jnp.float32).reshape(c, 1)

    cost = pl.CostEstimate(
        flops=5 * n * c * m,
        transcendentals=c,
        bytes_accessed=2 * n * c * m * 4 + 2 * c * 4,
    )

    out3d = pl.pallas_call(
        _bn_kernel,
        out_shape=jax.ShapeDtypeStruct((n, c, m), jnp.float32),
        in_specs=[
            pl.BlockSpec((n, c, m), lambda: (0, 0, 0)),
            pl.BlockSpec((c, 1), lambda: (0, 0)),
            pl.BlockSpec((c, 1), lambda: (0, 0)),
        ],
        out_specs=pl.BlockSpec((n, c, m), lambda: (0, 0, 0)),
        input_output_aliases={0: 0},   # output reuses x's HBM buffer
        cost_estimate=cost,
    )(x3d, g2, b2)

    return out3d.reshape(n, c, h, w)


# Donate x so the in-place alias is honored (no XLA protective copy).
batchnorm2d_pallas = jax.jit(_bn_forward, donate_argnums=(0,))


def batchnorm2d_ref(x_nchw, gamma, beta):
    mean = jnp.mean(x_nchw, axis=(0, 2, 3), keepdims=True)
    var = jnp.mean((x_nchw - mean) ** 2, axis=(0, 2, 3), keepdims=True)
    g = gamma.reshape(1, -1, 1, 1)
    b = beta.reshape(1, -1, 1, 1)
    return (x_nchw - mean) * jax.lax.rsqrt(var + EPS) * g + b


if __name__ == "__main__":
    key = jax.random.PRNGKey(0)
    N, C, H, W = 1, 64, 25, 25  # matches the module's x60 shape
    x = jax.random.normal(key, (N, C, H, W), dtype=jnp.float32)

    # Deterministic non-trivial affine params so the affine path is exercised.
    gamma = 1.0 + 0.01 * jnp.arange(C, dtype=jnp.float32)
    beta = 0.05 * jnp.arange(C, dtype=jnp.float32) - 0.5

    # Reference first: x is donated to the kernel call below.
    ref = batchnorm2d_ref(x, gamma, beta)
    ref = jax.block_until_ready(ref)

    out = batchnorm2d_pallas(x, gamma, beta)
    out = jax.block_until_ready(out)

    assert out.shape == (N, C, H, W)
    assert jnp.allclose(out, ref, atol=1e-4, rtol=1e-4)

    print("KERNEL_OK")
</pallas_src>

<mosaic_0001>
module attributes {stable_mosaic.version = 11 : i64} {
  func.func @_bn_kernel(%arg0: memref<1x64x625xf32, #tpu.memory_space<vmem>>, %arg1: memref<64x1xf32, #tpu.memory_space<vmem>>, %arg2: memref<64x1xf32, #tpu.memory_space<vmem>>, %arg3: memref<1x64x625xf32, #tpu.memory_space<vmem>>) attributes {dimension_semantics = [], scalar_prefetch = 0 : i64, scratch_operands = 0 : i64, tpu.core_type = #tpu.core_type<tc>} {
    %c0 = arith.constant 0 : index
    %c0_0 = arith.constant 0 : index
    %c0_1 = arith.constant 0 : index
    %0 = vector.load %arg0[%c0, %c0_0, %c0_1] : memref<1x64x625xf32, #tpu.memory_space<vmem>>, vector<1x64x625xf32>
    %cst = arith.constant dense<0.000000e+00> : vector<64xf32>
    %1 = vector.multi_reduction <add>, %0, %cst [0, 2] : vector<1x64x625xf32> to vector<64xf32>
    %2 = vector.shape_cast %1 : vector<64xf32> to vector<1x64x1xf32>
    %3 = arith.mulf %0, %0 : vector<1x64x625xf32>
    %cst_2 = arith.constant dense<0.000000e+00> : vector<64xf32>
    %4 = vector.multi_reduction <add>, %3, %cst_2 [0, 2] : vector<1x64x625xf32> to vector<64xf32>
    %5 = vector.shape_cast %4 : vector<64xf32> to vector<1x64x1xf32>
    %cst_3 = arith.constant 1.600000e-03 : f32
    %6 = vector.broadcast %cst_3 : f32 to vector<1x64x1xf32>
    %7 = arith.mulf %2, %6 : vector<1x64x1xf32>
    %cst_4 = arith.constant 1.600000e-03 : f32
    %8 = vector.broadcast %cst_4 : f32 to vector<1x64x1xf32>
    %9 = arith.mulf %5, %8 : vector<1x64x1xf32>
    %10 = arith.mulf %7, %7 : vector<1x64x1xf32>
    %11 = arith.subf %9, %10 : vector<1x64x1xf32>
    %cst_5 = arith.constant 0.000000e+00 : f32
    %12 = vector.broadcast %cst_5 : f32 to vector<1x64x1xf32>
    %13 = arith.maximumf %11, %12 : vector<1x64x1xf32>
    %cst_6 = arith.constant 1.000000e-03 : f32
    %14 = vector.broadcast %cst_6 : f32 to vector<1x64x1xf32>
    %15 = arith.addf %13, %14 : vector<1x64x1xf32>
    %16 = math.rsqrt %15 : vector<1x64x1xf32>
    %c0_7 = arith.constant 0 : index
    %c0_8 = arith.constant 0 : index
    %17 = vector.load %arg1[%c0_7, %c0_8] : memref<64x1xf32, #tpu.memory_space<vmem>>, vector<64x1xf32>
    %c0_9 = arith.constant 0 : index
    %c0_10 = arith.constant 0 : index
    %18 = vector.load %arg2[%c0_9, %c0_10] : memref<64x1xf32, #tpu.memory_space<vmem>>, vector<64x1xf32>
    %19 = vector.shape_cast %17 : vector<64x1xf32> to vector<1x64x1xf32>
    %20 = arith.mulf %16, %19 : vector<1x64x1xf32>
    %21 = arith.mulf %7, %20 : vector<1x64x1xf32>
    %22 = vector.shape_cast %18 : vector<64x1xf32> to vector<1x64x1xf32>
    %23 = arith.subf %22, %21 : vector<1x64x1xf32>
    %c0_11 = arith.constant 0 : index
    %c0_12 = arith.constant 0 : index
    %c0_13 = arith.constant 0 : index
    %24 = vector.load %arg0[%c0_11, %c0_12, %c0_13] : memref<1x64x625xf32, #tpu.memory_space<vmem>>, vector<1x64x625xf32>
    %25 = vector.broadcast %20 : vector<1x64x1xf32> to vector<1x64x625xf32>
    %26 = arith.mulf %24, %25 : vector<1x64x625xf32>
    %27 = vector.broadcast %23 : vector<1x64x1xf32> to vector<1x64x625xf32>
    %28 = arith.addf %26, %27 : vector<1x64x625xf32>
    %c0_14 = arith.constant 0 : index
    %c0_15 = arith.constant 0 : index
    %c0_16 = arith.constant 0 : index
    %29 = vector.load %arg3[%c0_14, %c0_15, %c0_16] : memref<1x64x625xf32, #tpu.memory_space<vmem>>, vector<1x64x625xf32>
    tpu.vector_store %arg3[%c0_14, %c0_15, %c0_16], %28 {strides = array<i32>} : memref<1x64x625xf32, #tpu.memory_space<vmem>>, vector<1x64x625xf32>,
    return
  }
}

</mosaic_0001>

<llo_original>
// kernel: _bn_forward.1
$region0: #{_bn_forward.1}
  #allocation0 [shape = 'u32[]', space=smem, size = 0x4, offset = 0x4, fixed_abs, tag = 'smem constant byte address 0x4 - core index']
  #allocation1 [shape = 'u32[144,128]{1,0:T(1,128)}', space=vmem, size = 0x12000, scoped, tag = 'internal scratch']
  %s0 = inlined_call_operand.vmem [shape: f32[1,64,625], index: 0, kind: input, shape index: {}, may-alias: {0,3}]
  %s1 = inlined_call_operand.vmem [shape: f32[64,1], index: 1, kind: input, shape index: {}]
  %s2 = inlined_call_operand.vmem [shape: f32[64,1], index: 2, kind: input, shape index: {}]
  %s3 = inlined_call_operand.vmem [shape: f32[1,64,625], index: 3, kind: output, shape index: {}, may-alias: {0,3}]
  %s4 = sld [smem:[#allocation0]]
  $region22: #{_bn_forward.1} parent=0
    _
  %s6 = ssub.s32 1, %s4
  %s7 = scalar_select 0, %s6, %s4
  // Predicated region
  $region2: #{_bn_forward.1} parent=0 // pred_check
    _
  $region3: #{_bn_forward.1} parent=0 // pred_check_branch
    %9 = sbr.rel (0) target = $region5
  $region4: #{_bn_forward.1} parent=0 // pred_region
    _
  $region5: #{_bn_forward.1} parent=0 // pred_fallthru
    _
  // Predicated region
  $region6: #{_bn_forward.1} parent=0 // pred_check
    _
  $region7: #{_bn_forward.1} parent=0 // pred_check_branch
    %11 = sbr.rel (0) target = $region9
  $region8: #{_bn_forward.1} parent=0 // pred_region
    _
  $region9: #{_bn_forward.1} parent=0 // pred_fallthru
    _
  // Predicated region
  $region10: #{_bn_forward.1} parent=0 // pred_check
    _
  $region11: #{_bn_forward.1} parent=0 // pred_check_branch
    %13 = sbr.rel (0) target = $region13
  $region12: #{_bn_forward.1} parent=0 // pred_region
    _
  $region13: #{_bn_forward.1} parent=0 // pred_fallthru
    _
  %v14 = vld [vmem:[%s0] sm:$0xff]
  %v15 = vld [vmem:[%s0 + $0x8] sm:$0xff]
  %v16 = vld [vmem:[%s0 + $0x10] sm:$0xff]
  %v17 = vld [vmem:[%s0 + $0x18] sm:$0xff]
  %v18 = vld [vmem:[%s0 + $0x20] sm:$0xff]
  %v19 = vld [vmem:[%s0 + $0x28] sm:$0xff]
  %v20 = vld [vmem:[%s0 + $0x30] sm:$0xff]
  %v21 = vld [vmem:[%s0 + $0x38] sm:$0xff]
  %v22 = vld [vmem:[%s0 + $0x40] sm:$0xff]
  %v23 = vld [vmem:[%s0 + $0x48] sm:$0xff]
  %v24 = vld [vmem:[%s0 + $0x50] sm:$0xff]
  %v25 = vld [vmem:[%s0 + $0x58] sm:$0xff]
  %v26 = vld [vmem:[%s0 + $0x60] sm:$0xff]
  %v27 = vld [vmem:[%s0 + $0x68] sm:$0xff]
  %v28 = vld [vmem:[%s0 + $0x70] sm:$0xff]
  %v29 = vld [vmem:[%s0 + $0x78] sm:$0xff]
  %v30 = vld [vmem:[%s0 + $0x80] sm:$0xff]
  %v31 = vld [vmem:[%s0 + $0x88] sm:$0xff]
  %v32 = vld [vmem:[%s0 + $0x90] sm:$0xff]
  %v33 = vld [vmem:[%s0 + $0x98] sm:$0xff]
  %v34 = vld [vmem:[%s0 + $0xa0] sm:$0xff]
  %v35 = vld [vmem:[%s0 + $0xa8] sm:$0xff]
  %v36 = vld [vmem:[%s0 + $0xb0] sm:$0xff]
  %v37 = vld [vmem:[%s0 + $0xb8] sm:$0xff]
  %v38 = vld [vmem:[%s0 + $0xc0] sm:$0xff]
  %v39 = vld [vmem:[%s0 + $0xc8] sm:$0xff]
  %v40 = vld [vmem:[%s0 + $0xd0] sm:$0xff]
  %v41 = vld [vmem:[%s0 + $0xd8] sm:$0xff]
  %v42 = vld [vmem:[%s0 + $0xe0] sm:$0xff]
  %v43 = vld [vmem:[%s0 + $0xe8] sm:$0xff]
  %v44 = vld [vmem:[%s0 + $0xf0] sm:$0xff]
  %v45 = vld [vmem:[%s0 + $0xf8] sm:$0xff]
  %v46 = vld [vmem:[%s0 + $0x100] sm:$0xff]
  %v47 = vld [vmem:[%s0 + $0x108] sm:$0xff]
  %v48 = vld [vmem:[%s0 + $0x110] sm:$0xff]
  %v49 = vld [vmem:[%s0 + $0x118] sm:$0xff]
  %v50 = vld [vmem:[%s0 + $0x120] sm:$0xff]
  %v51 = vld [vmem:[%s0 + $0x128] sm:$0xff]
  %v52 = vld [vmem:[%s0 + $0x130] sm:$0xff]
  %v53 = vld [vmem:[%s0 + $0x138] sm:$0xff]
  %v54 = vadd.f32 %v14, %v15
  %v55 = vadd.f32 %v54, %v16
  %v56 = vadd.f32 %v55, %v17
  %vm57 = vcmask 924672
  %v58 = vsel %vm57, %v18, 0.0
  %v59 = vadd.f32 %v56, %v58
  %60 = vadd.xlane.f32.xlu0 %v59
  %v61 = vpop.xlane.xlu0 %60
  %v62 = vadd.f32 %v19, %v20
  %v63 = vadd.f32 %v62, %v21
  %v64 = vadd.f32 %v63, %v22
  %v65 = vsel %vm57, %v23, 0.0
  %v66 = vadd.f32 %v64, %v65
  %67 = vadd.xlane.f32.xlu0 %v66
  %v68 = vpop.xlane.xlu0 %67
  %v69 = vadd.f32 %v24, %v25
  %v70 = vadd.f32 %v69, %v26
  %v71 = vadd.f32 %v70, %v27
  %v72 = vsel %vm57, %v28, 0.0
  %v73 = vadd.f32 %v71, %v72
  %74 = vadd.xlane.f32.xlu0 %v73
  %v75 = vpop.xlane.xlu0 %74
  %v76 = vadd.f32 %v29, %v30
  %v77 = vadd.f32 %v76, %v31
  %v78 = vadd.f32 %v77, %v32
  %v79 = vsel %vm57, %v33, 0.0
  %v80 = vadd.f32 %v78, %v79
  %81 = vadd.xlane.f32.xlu0 %v80
  %v82 = vpop.xlane.xlu0 %81
  %v83 = vadd.f32 %v34, %v35
  %v84 = vadd.f32 %v83, %v36
  %v85 = vadd.f32 %v84, %v37
  %v86 = vsel %vm57, %v38, 0.0
  %v87 = vadd.f32 %v85, %v86
  %88 = vadd.xlane.f32.xlu0 %v87
  %v89 = vpop.xlane.xlu0 %88
  %v90 = vadd.f32 %v39, %v40
  %v91 = vadd.f32 %v90, %v41
  %v92 = vadd.f32 %v91, %v42
  %v93 = vsel %vm57, %v43, 0.0
  %v94 = vadd.f32 %v92, %v93
  %95 = vadd.xlane.f32.xlu0 %v94
  %v96 = vpop.xlane.xlu0 %95
  %v97 = vadd.f32 %v44, %v45
  %v98 = vadd.f32 %v97, %v46
  %v99 = vadd.f32 %v98, %v47
  %v100 = vsel %vm57, %v48, 0.0
  %v101 = vadd.f32 %v99, %v100
  %102 = vadd.xlane.f32.xlu0 %v101
  %v103 = vpop.xlane.xlu0 %102
  %v104 = vadd.f32 %v49, %v50
  %v105 = vadd.f32 %v104, %v51
  %v106 = vadd.f32 %v105, %v52
  %v107 = vsel %vm57, %v53, 0.0
  %v108 = vadd.f32 %v106, %v107
  %109 = vadd.xlane.f32.xlu0 %v108
  %v110 = vpop.xlane.xlu0 %109
  %v111 = vmul.f32 %v14, %v14
  %v112 = vmul.f32 %v15, %v15
  %v113 = vmul.f32 %v16, %v16
  %v114 = vmul.f32 %v17, %v17
  %v115 = vmul.f32 %v18, %v18
  %v116 = vmul.f32 %v19, %v19
  %v117 = vmul.f32 %v20, %v20
  %v118 = vmul.f32 %v21, %v21
  %v119 = vmul.f32 %v22, %v22
  %v120 = vmul.f32 %v23, %v23
  %v121 = vmul.f32 %v24, %v24
  %v122 = vmul.f32 %v25, %v25
  %v123 = vmul.f32 %v26, %v26
  %v124 = vmul.f32 %v27, %v27
  %v125 = vmul.f32 %v28, %v28
  %v126 = vmul.f32 %v29, %v29
  %v127 = vmul.f32 %v30, %v30
  %v128 = vmul.f32 %v31, %v31
  %v129 = vmul.f32 %v32, %v32
  %v130 = vmul.f32 %v33, %v33
  %v131 = vmul.f32 %v34, %v34
  %v132 = vmul.f32 %v35, %v35
  %v133 = vmul.f32 %v36, %v36
  %v134 = vmul.f32 %v37, %v37
  %v135 = vmul.f32 %v38, %v38
  %v136 = vmul.f32 %v39, %v39
  %v137 = vmul.f32 %v40, %v40
  %v138 = vmul.f32 %v41, %v41
  %v139 = vmul.f32 %v42, %v42
  %v140 = vmul.f32 %v43, %v43
  %v141 = vmul.f32 %v44, %v44
  %v142 = vmul.f32 %v45, %v45
  %v143 = vmul.f32 %v46, %v46
  %v144 = vmul.f32 %v47, %v47
  %v145 = vmul.f32 %v48, %v48
  %v146 = vmul.f32 %v49, %v49
  %v147 = vmul.f32 %v50, %v50
  %v148 = vmul.f32 %v51, %v51
  %v149 = vmul.f32 %v52, %v52
  %v150 = vmul.f32 %v53, %v53
  %v151 = vadd.f32 %v111, %v112
  %v152 = vadd.f32 %v151, %v113
  %v153 = vadd.f32 %v152, %v114
  %v154 = vsel %vm57, %v115, 0.0
  %v155 = vadd.f32 %v153, %v154
  %156 = vadd.xlane.f32.xlu0 %v155
  %v157 = vpop.xlane.xlu0 %156
  %v158 = vadd.f32 %v116, %v117
  %v159 = vadd.f32 %v158, %v118
  %v160 = vadd.f32 %v159, %v119
  %v161 = vsel %vm57, %v120, 0.0
  %v162 = vadd.f32 %v160, %v161
  %163 = vadd.xlane.f32.xlu0 %v162
  %v164 = vpop.xlane.xlu0 %163
  %v165 = vadd.f32 %v121, %v122
  %v166 = vadd.f32 %v165, %v123
  %v167 = vadd.f32 %v166, %v124
  %v168 = vsel %vm57, %v125, 0.0
  %v169 = vadd.f32 %v167, %v168
  %170 = vadd.xlane.f32.xlu0 %v169
  %v171 = vpop.xlane.xlu0 %170
  %v172 = vadd.f32 %v126, %v127
  %v173 = vadd.f32 %v172, %v128
  %v174 = vadd.f32 %v173, %v129
  %v175 = vsel %vm57, %v130, 0.0
  %v176 = vadd.f32 %v174, %v175
  %177 = vadd.xlane.f32.xlu0 %v176
  %v178 = vpop.xlane.xlu0 %177
  %v179 = vadd.f32 %v131, %v132
  %v180 = vadd.f32 %v179, %v133
  %v181 = vadd.f32 %v180, %v134
  %v182 = vsel %vm57, %v135, 0.0
  %v183 = vadd.f32 %v181, %v182
  %184 = vadd.xlane.f32.xlu0 %v183
  %v185 = vpop.xlane.xlu0 %184
  %v186 = vadd.f32 %v136, %v137
  %v187 = vadd.f32 %v186, %v138
  %v188 = vadd.f32 %v187, %v139
  %v189 = vsel %vm57, %v140, 0.0
  %v190 = vadd.f32 %v188, %v189
  %191 = vadd.xlane.f32.xlu0 %v190
  %v192 = vpop.xlane.xlu0 %191
  %v193 = vadd.f32 %v141, %v142
  %v194 = vadd.f32 %v193, %v143
  %v195 = vadd.f32 %v194, %v144
  %v196 = vsel %vm57, %v145, 0.0
  %v197 = vadd.f32 %v195, %v196
  %198 = vadd.xlane.f32.xlu0 %v197
  %v199 = vpop.xlane.xlu0 %198
  %v200 = vadd.f32 %v146, %v147
  %v201 = vadd.f32 %v200, %v148
  %v202 = vadd.f32 %v201, %v149
  %v203 = vsel %vm57, %v150, 0.0
  %v204 = vadd.f32 %v202, %v203
  %205 = vadd.xlane.f32.xlu0 %v204
  %v206 = vpop.xlane.xlu0 %205
  %v207 = vmul.f32 %v61, 0.0016
  %v208 = vmul.f32 %v68, 0.0016
  %v209 = vmul.f32 %v75, 0.0016
  %v210 = vmul.f32 %v82, 0.0016
  %v211 = vmul.f32 %v89, 0.0016
  %v212 = vmul.f32 %v96, 0.0016
  %v213 = vmul.f32 %v103, 0.0016
  %v214 = vmul.f32 %v110, 0.0016
  %v215 = vmul.f32 %v157, 0.0016
  %v216 = vmul.f32 %v164, 0.0016
  %v217 = vmul.f32 %v171, 0.0016
  %v218 = vmul.f32 %v178, 0.0016
  %v219 = vmul.f32 %v185, 0.0016
  %v220 = vmul.f32 %v192, 0.0016
  %v221 = vmul.f32 %v199, 0.0016
  %v222 = vmul.f32 %v206, 0.0016
  %v223 = vmul.f32 %v207, %v207
  %v224 = vmul.f32 %v208, %v208
  %v225 = vmul.f32 %v209, %v209
  %v226 = vmul.f32 %v210, %v210
  %v227 = vmul.f32 %v211, %v211
  %v228 = vmul.f32 %v212, %v212
  %v229 = vmul.f32 %v213, %v213
  %v230 = vmul.f32 %v214, %v214
  %v231 = vsub.f32 %v215, %v223
  %v232 = vsub.f32 %v216, %v224
  %v233 = vsub.f32 %v217, %v225
  %v234 = vsub.f32 %v218, %v226
  %v235 = vsub.f32 %v219, %v227
  %v236 = vsub.f32 %v220, %v228
  %v237 = vsub.f32 %v221, %v229
  %v238 = vsub.f32 %v222, %v230
  %v239 = vmax.f32 %v231, 0.0
  %v240 = vmax.f32 %v232, 0.0
  %v241 = vmax.f32 %v233, 0.0
  %v242 = vmax.f32 %v234, 0.0
  %v243 = vmax.f32 %v235, 0.0
  %v244 = vmax.f32 %v236, 0.0
  %v245 = vmax.f32 %v237, 0.0
  %v246 = vmax.f32 %v238, 0.0
  %v247 = vadd.f32 %v239, 0.001
  %v248 = vadd.f32 %v240, 0.001
  %v249 = vadd.f32 %v241, 0.001
  %v250 = vadd.f32 %v242, 0.001
  %v251 = vadd.f32 %v243, 0.001
  %v252 = vadd.f32 %v244, 0.001
  %v253 = vadd.f32 %v245, 0.001
  %v254 = vadd.f32 %v246, 0.001
  %v255 = vrsqrt.pop %v247
  %v256 = vrsqrt.pop %v248
  %v257 = vrsqrt.pop %v249
  %v258 = vrsqrt.pop %v250
  %v259 = vrsqrt.pop %v251
  %v260 = vrsqrt.pop %v252
  %v261 = vrsqrt.pop %v253
  %v262 = vrsqrt.pop %v254
  %v263 = vld [vmem:[%s1] sm:$0xff]
  %v264 = vld [vmem:[%s1 + $0x8] sm:$0xff]
  %v265 = vld [vmem:[%s1 + $0x10] sm:$0xff]
  %v266 = vld [vmem:[%s1 + $0x18] sm:$0xff]
  %v267 = vld [vmem:[%s1 + $0x20] sm:$0xff]
  %v268 = vld [vmem:[%s1 + $0x28] sm:$0xff]
  %v269 = vld [vmem:[%s1 + $0x30] sm:$0xff]
  %v270 = vld [vmem:[%s1 + $0x38] sm:$0xff]
  %v271 = vld [vmem:[%s2] sm:$0xff]
  %v272 = vld [vmem:[%s2 + $0x8] sm:$0xff]
  %v273 = vld [vmem:[%s2 + $0x10] sm:$0xff]
  %v274 = vld [vmem:[%s2 + $0x18] sm:$0xff]
  %v275 = vld [vmem:[%s2 + $0x20] sm:$0xff]
  %v276 = vld [vmem:[%s2 + $0x28] sm:$0xff]
  %v277 = vld [vmem:[%s2 + $0x30] sm:$0xff]
  %v278 = vld [vmem:[%s2 + $0x38] sm:$0xff]
  %v279 = vmul.f32 %v255, %v263
  %v280 = vmul.f32 %v256, %v264
  %v281 = vmul.f32 %v257, %v265
  %v282 = vmul.f32 %v258, %v266
  %v283 = vmul.f32 %v259, %v267
  %v284 = vmul.f32 %v260, %v268
  %v285 = vmul.f32 %v261, %v269
  %v286 = vmul.f32 %v262, %v270
  %v287 = vmul.f32 %v207, %v279
  %v288 = vmul.f32 %v208, %v280
  %v289 = vmul.f32 %v209, %v281
  %v290 = vmul.f32 %v210, %v282
  %v291 = vmul.f32 %v211, %v283
  %v292 = vmul.f32 %v212, %v284
  %v293 = vmul.f32 %v213, %v285
  %v294 = vmul.f32 %v214, %v286
  %v295 = vsub.f32 %v271, %v287
  %v296 = vsub.f32 %v272, %v288
  %v297 = vsub.f32 %v273, %v289
  %v298 = vsub.f32 %v274, %v290
  %v299 = vsub.f32 %v275, %v291
  %v300 = vsub.f32 %v276, %v292
  %v301 = vsub.f32 %v277, %v293
  %v302 = vsub.f32 %v278, %v294
  %304 = vset.pattern.permute.xlu0 0
  %305 = vperm.xlu0 %304, %v279
  %v306 = vpop.permute.xlu0 %305
  %309 = vset.pattern.permute.xlu0 0
  %310 = vperm.xlu0 %309, %v280
  %v311 = vpop.permute.xlu0 %310
  %314 = vset.pattern.permute.xlu0 0
  %315 = vperm.xlu0 %314, %v281
  %v316 = vpop.permute.xlu0 %315
  %319 = vset.pattern.permute.xlu0 0
  %320 = vperm.xlu0 %319, %v282
  %v321 = vpop.permute.xlu0 %320
  %324 = vset.pattern.permute.xlu0 0
  %325 = vperm.xlu0 %324, %v283
  %v326 = vpop.permute.xlu0 %325
  %329 = vset.pattern.permute.xlu0 0
  %330 = vperm.xlu0 %329, %v284
  %v331 = vpop.permute.xlu0 %330
  %334 = vset.pattern.permute.xlu0 0
  %335 = vperm.xlu0 %334, %v285
  %v336 = vpop.permute.xlu0 %335
  %339 = vset.pattern.permute.xlu0 0
  %340 = vperm.xlu0 %339, %v286
  %v341 = vpop.permute.xlu0 %340
  %v343 = vmul.f32 %v14, %v306
  %v344 = vmul.f32 %v15, %v306
  %v345 = vmul.f32 %v16, %v306
  %v346 = vmul.f32 %v17, %v306
  %v347 = vmul.f32 %v18, %v306
  %v348 = vmul.f32 %v19, %v311
  %v349 = vmul.f32 %v20, %v311
  %v350 = vmul.f32 %v21, %v311
  %v351 = vmul.f32 %v22, %v311
  %v352 = vmul.f32 %v23, %v311
  %v353 = vmul.f32 %v24, %v316
  %v354 = vmul.f32 %v25, %v316
  %v355 = vmul.f32 %v26, %v316
  %v356 = vmul.f32 %v27, %v316
  %v357 = vmul.f32 %v28, %v316
  %v358 = vmul.f32 %v29, %v321
  %v359 = vmul.f32 %v30, %v321
  %v360 = vmul.f32 %v31, %v321
  %v361 = vmul.f32 %v32, %v321
  %v362 = vmul.f32 %v33, %v321
  %v363 = vmul.f32 %v34, %v326
  %v364 = vmul.f32 %v35, %v326
  %v365 = vmul.f32 %v36, %v326
  %v366 = vmul.f32 %v37, %v326
  %v367 = vmul.f32 %v38, %v326
  %v368 = vmul.f32 %v39, %v331
  %v369 = vmul.f32 %v40, %v331
  %v370 = vmul.f32 %v41, %v331
  %v371 = vmul.f32 %v42, %v331
  %v372 = vmul.f32 %v43, %v331
  %v373 = vmul.f32 %v44, %v336
  %v374 = vmul.f32 %v45, %v336
  %v375 = vmul.f32 %v46, %v336
  %v376 = vmul.f32 %v47, %v336
  %v377 = vmul.f32 %v48, %v336
  %v378 = vmul.f32 %v49, %v341
  %v379 = vmul.f32 %v50, %v341
  %v380 = vmul.f32 %v51, %v341
  %v381 = vmul.f32 %v52, %v341
  %v382 = vmul.f32 %v53, %v341
  %384 = vset.pattern.permute.xlu0 0
  %385 = vperm.xlu0 %384, %v295
  %v386 = vpop.permute.xlu0 %385
  %389 = vset.pattern.permute.xlu0 0
  %390 = vperm.xlu0 %389, %v296
  %v391 = vpop.permute.xlu0 %390
  %394 = vset.pattern.permute.xlu0 0
  %395 = vperm.xlu0 %394, %v297
  %v396 = vpop.permute.xlu0 %395
  %399 = vset.pattern.permute.xlu0 0
  %400 = vperm.xlu0 %399, %v298
  %v401 = vpop.permute.xlu0 %400
  %404 = vset.pattern.permute.xlu0 0
  %405 = vperm.xlu0 %404, %v299
  %v406 = vpop.permute.xlu0 %405
  %409 = vset.pattern.permute.xlu0 0
  %410 = vperm.xlu0 %409, %v300
  %v411 = vpop.permute.xlu0 %410
  %414 = vset.pattern.permute.xlu0 0
  %415 = vperm.xlu0 %414, %v301
  %v416 = vpop.permute.xlu0 %415
  %419 = vset.pattern.permute.xlu0 0
  %420 = vperm.xlu0 %419, %v302
  %v421 = vpop.permute.xlu0 %420
  %v423 = vadd.f32 %v343, %v386
  %v424 = vadd.f32 %v344, %v386
  %v425 = vadd.f32 %v345, %v386
  %v426 = vadd.f32 %v346, %v386
  %v427 = vadd.f32 %v347, %v386
  %v428 = vadd.f32 %v348, %v391
  %v429 = vadd.f32 %v349, %v391
  %v430 = vadd.f32 %v350, %v391
  %v431 = vadd.f32 %v351, %v391
  %v432 = vadd.f32 %v352, %v391
  %v433 = vadd.f32 %v353, %v396
  %v434 = vadd.f32 %v354, %v396
  %v435 = vadd.f32 %v355, %v396
  %v436 = vadd.f32 %v356, %v396
  %v437 = vadd.f32 %v357, %v396
  %v438 = vadd.f32 %v358, %v401
  %v439 = vadd.f32 %v359, %v401
  %v440 = vadd.f32 %v360, %v401
  %v441 = vadd.f32 %v361, %v401
  %v442 = vadd.f32 %v362, %v401
  %v443 = vadd.f32 %v363, %v406
  %v444 = vadd.f32 %v364, %v406
  %v445 = vadd.f32 %v365, %v406
  %v446 = vadd.f32 %v366, %v406
  %v447 = vadd.f32 %v367, %v406
  %v448 = vadd.f32 %v368, %v411
  %v449 = vadd.f32 %v369, %v411
  %v450 = vadd.f32 %v370, %v411
  %v451 = vadd.f32 %v371, %v411
  %v452 = vadd.f32 %v372, %v411
  %v453 = vadd.f32 %v373, %v416
  %v454 = vadd.f32 %v374, %v416
  %v455 = vadd.f32 %v375, %v416
  %v456 = vadd.f32 %v376, %v416
  %v457 = vadd.f32 %v377, %v416
  %v458 = vadd.f32 %v378, %v421
  %v459 = vadd.f32 %v379, %v421
  %v460 = vadd.f32 %v380, %v421
  %v461 = vadd.f32 %v381, %v421
  %v462 = vadd.f32 %v382, %v421
  %463 = vst [vmem:[%s3] sm:$0xff] %v423
  %464 = vst [vmem:[%s3 + $0x8] sm:$0xff] %v424
  %465 = vst [vmem:[%s3 + $0x10] sm:$0xff] %v425
  %466 = vst [vmem:[%s3 + $0x18] sm:$0xff] %v426
  %467 = vst.msk [vmem:[%s3 + $0x20] sm:$0xff] %vm57, %v427
  %468 = vst [vmem:[%s3 + $0x28] sm:$0xff] %v428
  %469 = vst [vmem:[%s3 + $0x30] sm:$0xff] %v429
  %470 = vst [vmem:[%s3 + $0x38] sm:$0xff] %v430
  %471 = vst [vmem:[%s3 + $0x40] sm:$0xff] %v431
  %472 = vst.msk [vmem:[%s3 + $0x48] sm:$0xff] %vm57, %v432
  %473 = vst [vmem:[%s3 + $0x50] sm:$0xff] %v433
  %474 = vst [vmem:[%s3 + $0x58] sm:$0xff] %v434
  %475 = vst [vmem:[%s3 + $0x60] sm:$0xff] %v435
  %476 = vst [vmem:[%s3 + $0x68] sm:$0xff] %v436
  %477 = vst.msk [vmem:[%s3 + $0x70] sm:$0xff] %vm57, %v437
  %478 = vst [vmem:[%s3 + $0x78] sm:$0xff] %v438
  %479 = vst [vmem:[%s3 + $0x80] sm:$0xff] %v439
  %480 = vst [vmem:[%s3 + $0x88] sm:$0xff] %v440
  %481 = vst [vmem:[%s3 + $0x90] sm:$0xff] %v441
  %482 = vst.msk [vmem:[%s3 + $0x98] sm:$0xff] %vm57, %v442
  %483 = vst [vmem:[%s3 + $0xa0] sm:$0xff] %v443
  %484 = vst [vmem:[%s3 + $0xa8] sm:$0xff] %v444
  %485 = vst [vmem:[%s3 + $0xb0] sm:$0xff] %v445
  %486 = vst [vmem:[%s3 + $0xb8] sm:$0xff] %v446
  %487 = vst.msk [vmem:[%s3 + $0xc0] sm:$0xff] %vm57, %v447
  %488 = vst [vmem:[%s3 + $0xc8] sm:$0xff] %v448
  %489 = vst [vmem:[%s3 + $0xd0] sm:$0xff] %v449
  %490 = vst [vmem:[%s3 + $0xd8] sm:$0xff] %v450
  %491 = vst [vmem:[%s3 + $0xe0] sm:$0xff] %v451
  %492 = vst.msk [vmem:[%s3 + $0xe8] sm:$0xff] %vm57, %v452
  %493 = vst [vmem:[%s3 + $0xf0] sm:$0xff] %v453
  %494 = vst [vmem:[%s3 + $0xf8] sm:$0xff] %v454
  %495 = vst [vmem:[%s3 + $0x100] sm:$0xff] %v455
  %496 = vst [vmem:[%s3 + $0x108] sm:$0xff] %v456
  %497 = vst.msk [vmem:[%s3 + $0x110] sm:$0xff] %vm57, %v457
  %498 = vst [vmem:[%s3 + $0x118] sm:$0xff] %v458
  %499 = vst [vmem:[%s3 + $0x120] sm:$0xff] %v459
  %500 = vst [vmem:[%s3 + $0x128] sm:$0xff] %v460
  %501 = vst [vmem:[%s3 + $0x130] sm:$0xff] %v461
  %502 = vst.msk [vmem:[%s3 + $0x138] sm:$0xff] %vm57, %v462
  // Predicated region
  $region14: #{_bn_forward.1} parent=0 // pred_check
    _
  $region15: #{_bn_forward.1} parent=0 // pred_check_branch
    %504 = sbr.rel (0) target = $region17
  $region16: #{_bn_forward.1} parent=0 // pred_region
    _
  $region17: #{_bn_forward.1} parent=0 // pred_fallthru
    _
  // Predicated region
  $region18: #{_bn_forward.1} parent=0 // pred_check
    _
  $region19: #{_bn_forward.1} parent=0 // pred_check_branch
    %506 = sbr.rel (0) target = $region21
  $region20: #{_bn_forward.1} parent=0 // pred_region
    _
  $region21: #{_bn_forward.1} parent=0 // pred_fallthru
    _

</llo_original>
